<compile_context>
chip_gen: v5e
topology: v5e:2x2
jax: 0.10.0
libtpu: 0.0.40
codegen_flags: <defaults>
</compile_context>

<pallas_src>
import functools

import jax
import jax.numpy as jnp
from jax.experimental import pallas as pl
from jax.experimental.pallas import tpu as pltpu

CODES = dict(zip("ACGTN", range(5)))
MUT_TOL = 0.1


def _round_up(x: int, m: int) -> int:
    return ((x + m - 1) // m) * m


def _default_tile(batch: int) -> int:
    """Largest tile whose double-buffered (padded) in+out blocks stay ~16 MiB."""
    bytes_per_base = _round_up(4 * batch, 8) * 4 + _round_up(batch, 32)  # out f32 + in i8
    tile = (16 * 1024 * 1024) // (2 * bytes_per_base)
    tile = (tile // 128) * 128
    return max(1024, min(tile, 256 * 1024))


def _choose_tiling(L: int, target_tile: int):
    """Tile (multiple of 128 lanes) + step count; >=2 (even) steps when possible
    so ("parallel",) can use both v7x TensorCores. Padding beyond round_up(L,128)
    is < one tile (at most a few hundred columns)."""
    L128 = _round_up(L, 128)
    max_steps = L128 // 128
    n = min(max(2, pl.cdiv(L128, max(target_tile, 128))), max_steps)
    if n > 1 and n % 2:
        n = min(n + 1, max_steps)
    tile = _round_up(pl.cdiv(L128, n), 128)
    n = pl.cdiv(L128, tile)
    return tile, n, tile * n


def _seq2tensor_noisy_kernel(codes_ref, out_ref, *, mut_tol, batch):
    # codes_ref: (B, T) int8 in VMEM ; out_ref: (4*B, T) float32 in VMEM
    t = codes_ref.shape[1]
    hi = jnp.float32(1.0 - 3.0 * mut_tol)     # one-hot hit
    lo = jnp.float32(mut_tol)                 # one-hot miss
    quarter = jnp.float32(0.25)               # 'N' position
    ch = jax.lax.broadcasted_iota(jnp.int32, (4, t), 0)    # channel index per row
    codes = codes_ref[...].astype(jnp.int32)                # upcast int8 once
    for b in range(batch):                                  # static unroll; B is small
        cb = codes[b:b + 1, :]                              # (1, T), sublane-broadcast below
        val = jnp.where(cb == ch, hi, lo)                   # single vselect (no cvt+mul+add)
        out_ref[4 * b:4 * b + 4, :] = jnp.where(cb == 4, quarter, val)


def seq2tensor_noisy_batch(codes, mut_tol=MUT_TOL, tile_l=None, trim=True):
    """codes: (B, L) integer nucleotide codes (0..4). Returns (B, 4, L) float32.

    With B a multiple of 2 the output block is (4*B, TILE) -> fully sublane-dense
    f32 writeback.  trim=False returns the lane-padded (B, 4, padded_L) array
    (tail columns are the 'N' encoding, 0.25) and skips an extra full-array HBM
    slice pass.
    """
    B, L = codes.shape
    if tile_l is None:
        tile_l = _default_tile(B)
    tile, n_steps, padded_L = _choose_tiling(L, tile_l)

    codes8 = codes.astype(jnp.int8)
    if padded_L != L:
        codes8 = jnp.pad(codes8, ((0, 0), (0, padded_L - L)), constant_values=4)  # pad with 'N'

    # VMEM budget from the *padded* block footprints:
    #   out block: round_up(4B, 8) sublanes * tile * 4 B   (x2 double buffers)
    #   in block : int8 pads to 32 sublanes * tile * 1 B   (x2 double buffers)
    # plus ~1x per-step headroom for the upcast/compare/select temporaries.
    per_step = _round_up(4 * B, 8) * tile * 4 + _round_up(B, 32) * tile
    vmem_bytes = max(4 * 1024 * 1024, min(3 * per_step + (2 << 20), 40 * 1024 * 1024))

    kernel = functools.partial(_seq2tensor_noisy_kernel, mut_tol=float(mut_tol), batch=B)
    out = pl.pallas_call(
        kernel,
        out_shape=jax.ShapeDtypeStruct((4 * B, padded_L), jnp.float32),
        grid=(n_steps,),
        in_specs=[pl.BlockSpec((B, tile), lambda i: (0, i), memory_space=pltpu.VMEM)],
        out_specs=pl.BlockSpec((4 * B, tile), lambda i: (0, i), memory_space=pltpu.VMEM),
        compiler_params=pltpu.CompilerParams(
            dimension_semantics=("parallel",),
            vmem_limit_bytes=int(vmem_bytes),
        ),
        cost_estimate=pl.CostEstimate(
            flops=int(24 * B * padded_L),            # ~6 cmp/select per output element
            transcendentals=0,
            bytes_accessed=int(17 * B * padded_L),   # 1 B/base int8 in + 16 B/base f32 out
        ),
    )(codes8)

    out = out.reshape(B, 4, padded_L)   # free: row-major (4B, P) == (B, 4, P)
    if trim and padded_L != L:
        out = out[:, :, :L]
    return out


def seq2tensor_noisy(codes_1d, mut_tol=MUT_TOL, tile_l=None, trim=True):
    """Single sequence (the module's forward): (L,) codes -> (4, L) float32.
    NOTE: with one sequence the (4, TILE) out block fills only 4 of 8 f32
    sublanes; prefer seq2tensor_noisy_batch with an even B for dense writeback."""
    return seq2tensor_noisy_batch(codes_1d[None, :], mut_tol, tile_l, trim)[0]


def string_to_codes(seq: str) -> jnp.ndarray:
    # TODO(synk): the Python str->code lookup (and the isinstance(FloatTensor)
    # passthrough branch) is host-side preprocessing with no Pallas equivalent.
    return jnp.array([CODES[c.upper()] for c in seq], dtype=jnp.int32)


def _reference(codes_1d, mut_tol=MUT_TOL):
    # Pure-JAX mirror of the PyTorch forward.
    code = jax.nn.one_hot(codes_1d, 5, dtype=jnp.float32)   # (L, 5)
    n_row = code[:, 4:5] == 1.0
    code = jnp.where(n_row, 0.25, code)
    code = code[:, :4]
    code = jnp.where(code == 0.0, mut_tol, code)
    code = jnp.where(code == 1.0, 1.0 - mut_tol * 3.0, code)
    return code.T                                            # (4, L)


if __name__ == "__main__":
    key = jax.random.PRNGKey(0)
    k1, k2 = jax.random.split(key)

    # Test 1: single sequence (module semantics), L=16.
    L1 = 16
    codes1 = jax.random.randint(k1, (L1,), 0, 5, dtype=jnp.int32)
    out1 = jax.block_until_ready(seq2tensor_noisy(codes1, MUT_TOL))
    ref1 = _reference(codes1, MUT_TOL)
    assert out1.shape == (4, L1), out1.shape
    assert jnp.allclose(out1, ref1, atol=1e-6)

    # Test 2: batched sublane-dense path, B=2, L=300 (multi-step grid + trim).
    B2, L2 = 2, 300
    codes2 = jax.random.randint(k2, (B2, L2), 0, 5, dtype=jnp.int32)
    out2 = jax.block_until_ready(seq2tensor_noisy_batch(codes2, MUT_TOL, tile_l=128))
    ref2 = jnp.stack([_reference(codes2[b], MUT_TOL) for b in range(B2)])
    assert out2.shape == (B2, 4, L2), out2.shape
    assert jnp.allclose(out2, ref2, atol=1e-6)

    # Test 3: no-trim fast path (skips the post-kernel slice); tail columns are
    # the 'N' encoding (0.25).
    out3 = jax.block_until_ready(
        seq2tensor_noisy_batch(codes2, MUT_TOL, tile_l=128, trim=False))
    assert out3.shape[2] % 128 == 0 and out3.shape[2] >= L2, out3.shape
    assert jnp.allclose(out3[:, :, :L2], ref2, atol=1e-6)
    assert jnp.allclose(out3[:, :, L2:], 0.25, atol=1e-6)

    print("KERNEL_OK")
</pallas_src>

<mosaic_0001>
module attributes {stable_mosaic.version = 11 : i64} {
  func.func @_seq2tensor_noisy_kernel(%arg0: i32, %arg1: memref<1x128xi8, #tpu.memory_space<vmem>>, %arg2: memref<4x128xf32, #tpu.memory_space<vmem>>) attributes {dimension_semantics = [#tpu.dimension_semantics<parallel>], iteration_bounds = array<i64: 1>, scalar_prefetch = 0 : i64, scratch_operands = 0 : i64, tpu.core_type = #tpu.core_type<tc>, window_params = [{transform_indices = @transform_0, window_bounds = array<i64: 1, 128>}, {transform_indices = @transform_1, window_bounds = array<i64: 4, 128>}]} {
    %0 = tpu.iota {dimensions = array<i32: 0>} : vector<4x128xi32>
    %c0 = arith.constant 0 : index
    %c0_0 = arith.constant 0 : index
    %1 = vector.load %arg1[%c0, %c0_0] : memref<1x128xi8, #tpu.memory_space<vmem>>, vector<1x128xi8>
    %2 = arith.extsi %1 : vector<1x128xi8> to vector<1x128xi32>
    %3 = vector.broadcast %2 : vector<1x128xi32> to vector<4x128xi32>
    %4 = arith.cmpi eq, %3, %0 : vector<4x128xi32>
    %cst = arith.constant 0.699999988 : f32
    %cst_1 = arith.constant 1.000000e-01 : f32
    %5 = vector.broadcast %cst : f32 to vector<4x128xf32>
    %6 = vector.broadcast %cst_1 : f32 to vector<4x128xf32>
    %7 = arith.select %4, %5, %6 : vector<4x128xi1>, vector<4x128xf32>
    %c4_i32 = arith.constant 4 : i32
    %8 = vector.broadcast %c4_i32 : i32 to vector<1x128xi32>
    %9 = arith.cmpi eq, %2, %8 : vector<1x128xi32>
    %cst_2 = arith.constant 2.500000e-01 : f32
    %10 = vector.shape_cast %9 : vector<1x128xi1> to vector<1x128xi1>
    %11 = vector.broadcast %10 : vector<1x128xi1> to vector<4x128xi1>
    %12 = vector.broadcast %cst_2 : f32 to vector<4x128xf32>
    %13 = arith.select %11, %12, %7 : vector<4x128xi1>, vector<4x128xf32>
    %c0_3 = arith.constant 0 : index
    %c0_4 = arith.constant 0 : index
    %14 = vector.load %arg2[%c0_3, %c0_4] : memref<4x128xf32, #tpu.memory_space<vmem>>, vector<4x128xf32>
    tpu.vector_store %arg2[%c0_3, %c0_4], %13 {strides = array<i32>} : memref<4x128xf32, #tpu.memory_space<vmem>>, vector<4x128xf32>,
    return
  }
  func.func @transform_0(%arg0: i32) -> (i32, i32) {
    %c0_i32 = arith.constant 0 : i32
    %c0_i32_0 = arith.constant 0 : i32
    return %c0_i32, %arg0 : i32, i32
  }
  func.func @transform_1(%arg0: i32) -> (i32, i32) {
    %c0_i32 = arith.constant 0 : i32
    %c0_i32_0 = arith.constant 0 : i32
    return %c0_i32, %arg0 : i32, i32
  }
}

</mosaic_0001>

<llo_original>
// kernel: tpu_custom_call.1
$region0: #{tpu_custom_call.1}
  #allocation0 [shape = 'u32[]', space=smem, size = 0x4, offset = 0x4, fixed_abs, tag = 'smem constant byte address 0x4 - core index']
  #allocation1 [shape = 'u32[72,128]{1,0:T(1,128)}', space=vmem, size = 0x9000, scoped, tag = 'internal scratch']
  %s0 = inlined_call_operand.hbm [shape: s8[1,128], index: 0, kind: input, shape index: {}]
  %s1 = inlined_call_operand.hbm [shape: f32[4,128], index: 1, kind: output, shape index: {}]
  %s2 = sld [smem:[#allocation0]]
  $region18: #{tpu_custom_call.1} parent=0
    _
  %s4 = ssub.s32 1, %s2
  %s5 = scalar_select 0, %s4, %s2
  $region1: #{tpu_custom_call.1} parent=0
    #allocation2 [shape = 'u8[512]{0}', space=vmem, size = 0x400, scoped, tag = 'input window, operand 0, single buffered']
    #allocation3 [shape = 's32[1]{0}', space=sflag, size = 0x4, scoped, tag = 'scoped memory for tpu_custom_call.1']
    #allocation4 [shape = 's32[1]{0}', space=sflag, size = 0x4, scoped, tag = 'scoped memory for tpu_custom_call.1']
    #allocation5 [shape = 'u8[2048]{0}', space=vmem, size = 0x800, scoped, tag = 'output window, operand 0, single buffered']
    %6 = vsyncpa [#allocation3], 0
    %7 = vsyncpa [#allocation4], 0
    // Predicated region
    $region2: #{tpu_custom_call.1} parent=1 // pred_check
      _
    $region3: #{tpu_custom_call.1} parent=1 // pred_check_branch
      %9 = sbr.rel (0) target = $region5
    $region4: #{tpu_custom_call.1} parent=1 // pred_region
      %11 = vsyncadd [#allocation3], 0
      %s13 = sshll.u32 %s0, 4
      %s14 = int_to_ptr.hbm [resolvable:$true] %s13
      %s15 = sshll.u32 [#allocation2], 4
      %s16 = int_to_ptr.vmem [resolvable:$true] %s15
      %18 = dma.hbm_to_vmem [thread:$0]  %s14, 16, %s16, [#allocation3]
    $region5: #{tpu_custom_call.1} parent=1 // pred_fallthru
      _
    // Predicated region
    $region6: #{tpu_custom_call.1} parent=1 // pred_check
      _
    $region7: #{tpu_custom_call.1} parent=1 // pred_check_branch
      %20 = sbr.rel (0) target = $region9
    $region8: #{tpu_custom_call.1} parent=1 // pred_region
      %22 = dma.done [#allocation3], 16
    $region9: #{tpu_custom_call.1} parent=1 // pred_fallthru
      _
    %v23 = vlaneseq
    %v24 = vshrl.u32 %v23, 7
    %v25 = vld [vmem:[#allocation2] sm:$0x1]
    %v26 = vunpack.c.0.s8 %v25
    %v27 = vperm.slane %v26, 0
    %vm28 = vcmp.eq.s32.totalorder %v27, %v24
    %v29 = vsel %vm28, 0.7, 0.1
    %vm30 = vcmp.eq.s32.totalorder %v26, 4
    %v31 = vsel %vm30, 1, 0
    %v32 = vperm.slane %v31, 0
    %vm33 = vcmp.eq.s32.totalorder %v32, 1
    %v34 = vsel %vm33, 0.25, %v29
    %35 = vst [vmem:[#allocation5] sm:$0xf] %v34
    // Predicated region
    $region10: #{tpu_custom_call.1} parent=1 // pred_check
      _
    $region11: #{tpu_custom_call.1} parent=1 // pred_check_branch
      %37 = sbr.rel (0) target = $region13
    $region12: #{tpu_custom_call.1} parent=1 // pred_region
      %39 = vsyncadd [#allocation4], 0
      %s41 = sshll.u32 [#allocation5], 4
      %s42 = int_to_ptr.vmem [resolvable:$true] %s41
      %s43 = sshll.u32 %s1, 4
      %s44 = int_to_ptr.hbm [resolvable:$true] %s43
      %46 = dma.vmem_to_hbm [thread:$0]  %s42, 64, %s44, [#allocation4]
    $region13: #{tpu_custom_call.1} parent=1 // pred_fallthru
      _
    // Predicated region
    $region14: #{tpu_custom_call.1} parent=1 // pred_check
      _
    $region15: #{tpu_custom_call.1} parent=1 // pred_check_branch
      %48 = sbr.rel (0) target = $region17
    $region16: #{tpu_custom_call.1} parent=1 // pred_region
      %50 = dma.done [#allocation4], 64
    $region17: #{tpu_custom_call.1} parent=1 // pred_fallthru
      _
    %51 = vsyncpa [#allocation3], 1
    %52 = vsyncpa [#allocation4], 1

</llo_original>
